<compile_context>
chip_gen: v5e
topology: v5e:2x2
jax: 0.10.0
libtpu: 0.0.40
codegen_flags: <defaults>
</compile_context>

<pallas_src>
import functools

import jax
import jax.numpy as jnp
from jax.experimental import pallas as pl
from jax.experimental.pallas import tpu as pltpu


def _trconv_block_kernel(x_ref, m_ref, shift_ref, o_ref, *, activation):
    # x_ref:     (1, 1, Qh, T*W*Cin)   bf16  phase/tap-gathered input rows
    # m_ref:     (1, T*W*Cin, OW*Cout) bf16  fused (h-tap, width-conv, scale) operator
    # shift_ref: (1, OW*Cout)          f32   folded bias / BN shift, tiled over OW
    # o_ref:     (1, 1, Qh, OW*Cout)   f32
    y = jnp.dot(x_ref[0, 0], m_ref[0], preferred_element_type=jnp.float32)
    y = y + shift_ref[...]
    if activation:
        y = jnp.maximum(y, 0.0)
    o_ref[0, 0] = y.astype(o_ref.dtype)


def transposed_conv2d_block(x_nchw, weight, bias, *, stride, padding,
                            activation=True, normalization='None',
                            bn_params=None, eps=1e-5,
                            compute_dtype=jnp.bfloat16):
    """Forward pass of TransposedConv2d_Block.

    x_nchw: (N, Cin, H, W)     float32
    weight: (Cin, Cout, K, K)  PyTorch ConvTranspose2d weight layout
    bias:   (Cout,) or None
    """
    N, Cin, H, W = x_nchw.shape
    Cin_w, Cout, K, K2 = weight.shape
    assert K == K2 and Cin_w == Cin
    s, p = int(stride), int(padding)

    OH = (H - 1) * s - 2 * p + K
    OW = (W - 1) * s - 2 * p + K
    # TODO(synk): PyTorch ConvTranspose2d's output_padding argument is not supported.

    # ---- static per-phase tap geometry along H (sub-pixel decomposition) ----
    # out[oh] with oh = s*qh + ph uses kernel rows kh = ph + p - s*e, input row ih = qh + e.
    e_start = [-((K - 1 - p - ph) // s) for ph in range(s)]
    e_end = [(ph + p) // s for ph in range(s)]
    T = max(1, max(e_end[ph] - e_start[ph] + 1 for ph in range(s)))
    Qh = -(-OH // s)                                        # ceil(OH / s)
    min_e = min(e_start)
    max_e = max(e_start[ph] + T - 1 for ph in range(s))
    pad_top = max(0, -min_e)
    pad_bot = max(0, (Qh - 1) + max_e - (H - 1))

    CT = T * W * Cin                                        # matmul contraction length
    OC = OW * Cout                                          # lane-dense output width

    # ---- fold bias (+ optional inference-mode batch-norm) into scale / shift ----
    if bias is None:
        bias = jnp.zeros((Cout,), jnp.float32)
    bias = bias.astype(jnp.float32)
    if normalization == 'batch_norm':
        # TODO(synk): training-mode BatchNorm (batch statistics) not implemented;
        #             inference-mode running stats are folded into scale/shift.
        gamma, beta, r_mean, r_var = bn_params
        scale = gamma.astype(jnp.float32) / jnp.sqrt(r_var.astype(jnp.float32) + eps)
        shift = beta.astype(jnp.float32) + (bias - r_mean.astype(jnp.float32)) * scale
    else:
        scale = jnp.ones((Cout,), jnp.float32)
        shift = bias
    shift_row = jnp.tile(shift, OW).reshape(1, OC)          # (1, OW*Cout), value shift[co]

    # ---- build fused per-phase weight operator M: (s, T*W*Cin, OW*Cout) ----
    # M[ph][(t, iw, ci), (ow, co)] = scale[co] * W[ci, co, kh(ph,t), ow + p - s*iw]
    # (zero where the kernel index falls outside [0, K) -> band structure handles the
    #  width boundaries, so no width padding of the input is needed at all).
    w_f32 = weight.astype(jnp.float32)                      # (Cin, Cout, K, Kw)
    w_kh_first = jnp.transpose(w_f32, (2, 0, 1, 3))         # (K, Cin, Cout, Kw)
    ph_idx = jnp.arange(s)[:, None]
    t_idx = jnp.arange(T)[None, :]
    e_start_arr = jnp.asarray(e_start, dtype=jnp.int32)[:, None]
    kh = ph_idx + p - s * (e_start_arr + t_idx)             # (s, T)
    valid_h = ((kh >= 0) & (kh < K)).astype(jnp.float32)
    kh_c = jnp.clip(kh, 0, K - 1)
    w_sel = w_kh_first[kh_c] * valid_h[:, :, None, None, None]   # (s, T, Cin, Cout, Kw)

    iw = jnp.arange(W)[:, None]
    ow = jnp.arange(OW)[None, :]
    kw_needed = ow + p - s * iw                             # (W, OW)
    G = (kw_needed[:, :, None] == jnp.arange(K)[None, None, :]).astype(jnp.float32)

    M6 = jnp.einsum('wok,ptcdk->ptwcod', G, w_sel)          # (s, T, W, Cin, OW, Cout)
    M6 = M6 * scale[None, None, None, None, None, :]
    M = M6.reshape(s, CT, OC).astype(compute_dtype)

    # ---- gather phase/tap-shifted input rows: X (N, s, Qh, T*W*Cin) ----
    x_nhwc = jnp.transpose(x_nchw, (0, 2, 3, 1)).astype(jnp.float32)
    x_pad = jnp.pad(x_nhwc, ((0, 0), (pad_top, pad_bot), (0, 0), (0, 0)))
    per_phase = []
    for ph in range(s):
        taps = []
        for t in range(T):
            r0 = e_start[ph] + t + pad_top
            taps.append(x_pad[:, r0:r0 + Qh])               # (N, Qh, W, Cin)
        per_phase.append(jnp.stack(taps, axis=2))           # (N, Qh, T, W, Cin)
    X = jnp.stack(per_phase, axis=1).reshape(N, s, Qh, CT).astype(compute_dtype)

    kernel = functools.partial(_trconv_block_kernel, activation=activation)

    out_k = pl.pallas_call(
        kernel,
        out_shape=jax.ShapeDtypeStruct((N, s, Qh, OC), jnp.float32),
        grid_spec=pltpu.PrefetchScalarGridSpec(
            num_scalar_prefetch=0,
            grid=(N, s),
            in_specs=[
                pl.BlockSpec((1, 1, Qh, CT), lambda n, ph: (n, ph, 0, 0)),
                pl.BlockSpec((1, CT, OC), lambda n, ph: (ph, 0, 0)),
                pl.BlockSpec((1, OC), lambda n, ph: (0, 0)),
            ],
            out_specs=pl.BlockSpec((1, 1, Qh, OC), lambda n, ph: (n, ph, 0, 0)),
        ),
        compiler_params=pltpu.CompilerParams(
            dimension_semantics=("parallel", "parallel")),
    )(X, M, shift_row)

    # ---- wrapper glue: un-interleave the h-phases, crop, back to NCHW ----
    y = out_k.reshape(N, s, Qh, OW, Cout)
    y = jnp.transpose(y, (0, 2, 1, 3, 4)).reshape(N, Qh * s, OW, Cout)
    y = y[:, :OH]
    return jnp.transpose(y, (0, 3, 1, 2))


if __name__ == "__main__":
    key = jax.random.PRNGKey(0)
    k_x, k_w, k_b = jax.random.split(key, 3)

    # Module config: ConvTranspose2d(4 -> 8, kernel=4, stride=2, padding=1, bias=True),
    # activation=True, normalization='None' (module default).
    N, Cin, H, W = 2, 4, 16, 16
    Cout, K, stride, padding = 8, 4, 2, 1

    x = jax.random.normal(k_x, (N, Cin, H, W), jnp.float32)
    fan = Cin * K * K
    bound = 1.0 / (fan ** 0.5)
    weight = jax.random.uniform(k_w, (Cin, Cout, K, K), jnp.float32, -bound, bound)
    bias = jax.random.uniform(k_b, (Cout,), jnp.float32, -bound, bound)

    out = transposed_conv2d_block(x, weight, bias, stride=stride, padding=padding,
                                  activation=True, normalization='None')
    out = jax.block_until_ready(out)

    # Pure-JAX reference (XLA transposed conv via lhs_dilation) on the same
    # bf16-rounded inputs the kernel consumes.
    xb = x.astype(jnp.bfloat16).astype(jnp.float32)
    wb = weight.astype(jnp.bfloat16).astype(jnp.float32)
    w_hwio = jnp.transpose(wb[:, :, ::-1, ::-1], (2, 3, 0, 1))     # (K, K, Cin, Cout)
    x_nhwc = jnp.transpose(xb, (0, 2, 3, 1))
    ref = jax.lax.conv_general_dilated(
        x_nhwc, w_hwio, window_strides=(1, 1),
        padding=[(K - 1 - padding, K - 1 - padding)] * 2,
        lhs_dilation=(stride, stride),
        dimension_numbers=('NHWC', 'HWIO', 'NHWC'),
        precision=jax.lax.Precision.HIGHEST)
    ref = jnp.maximum(ref + bias, 0.0)
    ref = jnp.transpose(ref, (0, 3, 1, 2))

    OH = (H - 1) * stride - 2 * padding + K
    assert out.shape == (N, Cout, OH, OH), out.shape
    err = float(jnp.max(jnp.abs(out - ref)))
    assert err < 1e-3, f"max abs error too large: {err}"
    print("KERNEL_OK")
</pallas_src>

<mosaic_0001>
module attributes {stable_mosaic.version = 11 : i64} {
  func.func @_trconv_block_kernel(%arg0: i32, %arg1: i32, %arg2: memref<1x1x16x128xbf16, #tpu.memory_space<vmem>>, %arg3: memref<1x128x256xbf16, #tpu.memory_space<vmem>>, %arg4: memref<1x256xf32, #tpu.memory_space<vmem>>, %arg5: memref<1x1x16x256xf32, #tpu.memory_space<vmem>>) attributes {dimension_semantics = [#tpu.dimension_semantics<parallel>, #tpu.dimension_semantics<parallel>], iteration_bounds = array<i64: 2, 2>, scalar_prefetch = 0 : i64, scratch_operands = 0 : i64, tpu.core_type = #tpu.core_type<tc>, window_params = [{transform_indices = @transform_0, window_bounds = array<i64: 1, 1, 16, 128>}, {transform_indices = @transform_1, window_bounds = array<i64: 1, 128, 256>}, {pipeline_mode = #tpu.pipeline_mode<synchronous>, transform_indices = @transform_2, window_bounds = array<i64: 1, 256>}, {transform_indices = @transform_3, window_bounds = array<i64: 1, 1, 16, 256>}]} {
    %c0 = arith.constant 0 : index
    %c0_0 = arith.constant 0 : index
    %c0_1 = arith.constant 0 : index
    %c0_2 = arith.constant 0 : index
    %0 = vector.load %arg2[%c0, %c0_0, %c0_1, %c0_2] : memref<1x1x16x128xbf16, #tpu.memory_space<vmem>>, vector<1x1x16x128xbf16>
    %1 = vector.shape_cast %0 : vector<1x1x16x128xbf16> to vector<16x128xbf16>
    %c0_3 = arith.constant 0 : index
    %c0_4 = arith.constant 0 : index
    %c0_5 = arith.constant 0 : index
    %2 = vector.load %arg3[%c0_3, %c0_4, %c0_5] : memref<1x128x256xbf16, #tpu.memory_space<vmem>>, vector<1x128x256xbf16>
    %3 = vector.shape_cast %2 : vector<1x128x256xbf16> to vector<128x256xbf16>
    %cst = arith.constant dense<0.000000e+00> : vector<16x256xf32>
    %4 = tpu.matmul %1, %3, %cst {dimension_numbers = #tpu.dot_dimension_numbers<[1], [0], [0], [1], [0, 0, 1, 1], [], []>} : vector<16x128xbf16>, vector<128x256xbf16>, vector<16x256xf32> -> vector<16x256xf32>
    %c0_6 = arith.constant 0 : index
    %c0_7 = arith.constant 0 : index
    %5 = vector.load %arg4[%c0_6, %c0_7] : memref<1x256xf32, #tpu.memory_space<vmem>>, vector<1x256xf32>
    %6 = vector.broadcast %5 : vector<1x256xf32> to vector<16x256xf32>
    %7 = arith.addf %4, %6 : vector<16x256xf32>
    %cst_8 = arith.constant 0.000000e+00 : f32
    %8 = vector.broadcast %cst_8 : f32 to vector<16x256xf32>
    %9 = arith.maximumf %7, %8 : vector<16x256xf32>
    %c0_9 = arith.constant 0 : index
    %c0_10 = arith.constant 0 : index
    %c0_11 = arith.constant 0 : index
    %c0_12 = arith.constant 0 : index
    %10 = vector.load %arg5[%c0_9, %c0_10, %c0_11, %c0_12] : memref<1x1x16x256xf32, #tpu.memory_space<vmem>>, vector<1x1x16x256xf32>
    %11 = vector.shape_cast %10 : vector<1x1x16x256xf32> to vector<16x256xf32>
    %12 = vector.shape_cast %9 : vector<16x256xf32> to vector<1x1x16x256xf32>
    tpu.vector_store %arg5[%c0_9, %c0_10, %c0_11, %c0_12], %12 {strides = array<i32>} : memref<1x1x16x256xf32, #tpu.memory_space<vmem>>, vector<1x1x16x256xf32>,
    return
  }
  func.func @transform_0(%arg0: i32, %arg1: i32) -> (i32, i32, i32, i32) {
    %c0_i32 = arith.constant 0 : i32
    %c0_i32_0 = arith.constant 0 : i32
    %c0_i32_1 = arith.constant 0 : i32
    return %arg0, %arg1, %c0_i32, %c0_i32_0 : i32, i32, i32, i32
  }
  func.func @transform_1(%arg0: i32, %arg1: i32) -> (i32, i32, i32) {
    %c0_i32 = arith.constant 0 : i32
    %c0_i32_0 = arith.constant 0 : i32
    %c0_i32_1 = arith.constant 0 : i32
    return %arg1, %c0_i32, %c0_i32_0 : i32, i32, i32
  }
  func.func @transform_2(%arg0: i32, %arg1: i32) -> (i32, i32) {
    %c0_i32 = arith.constant 0 : i32
    %c0_i32_0 = arith.constant 0 : i32
    %c0_i32_1 = arith.constant 0 : i32
    return %c0_i32, %c0_i32_0 : i32, i32
  }
  func.func @transform_3(%arg0: i32, %arg1: i32) -> (i32, i32, i32, i32) {
    %c0_i32 = arith.constant 0 : i32
    %c0_i32_0 = arith.constant 0 : i32
    %c0_i32_1 = arith.constant 0 : i32
    return %arg0, %arg1, %c0_i32, %c0_i32_0 : i32, i32, i32, i32
  }
}

</mosaic_0001>

<llo_original>
// kernel: tpu_custom_call.1
$region0: #{tpu_custom_call.1}
  #allocation0 [shape = 'u32[]', space=smem, size = 0x4, offset = 0x4, fixed_abs, tag = 'smem constant byte address 0x4 - core index']
  #allocation1 [shape = 'u32[72,128]{1,0:T(1,128)}', space=vmem, size = 0x9000, scoped, tag = 'internal scratch']
  %s0 = inlined_call_operand.hbm [shape: bf16[2,2,16,128], index: 0, kind: input, shape index: {}]
  %s1 = inlined_call_operand.hbm [shape: bf16[2,128,256], index: 1, kind: input, shape index: {}]
  %s2 = inlined_call_operand.hbm [shape: f32[1,256], index: 2, kind: input, shape index: {}]
  %s3 = inlined_call_operand.hbm [shape: f32[2,2,16,256], index: 3, kind: output, shape index: {}]
  %s4 = sld [smem:[#allocation0]]
  $region57: #{tpu_custom_call.1} parent=0
    _
  %s6 = ssub.s32 1, %s4
  %s7 = scalar_select 0, %s6, %s4
  $region1: #{tpu_custom_call.1} parent=0
    #allocation2 [shape = 'u8[8192]{0}', space=vmem, size = 0x2000, scoped, tag = 'input window, operand 0']
    #allocation3 [shape = 's32[2]{0}', space=sflag, size = 0x8, scoped, tag = 'scoped memory for tpu_custom_call.1']
    #allocation4 [shape = 's32[2]{0}', space=sflag, size = 0x8, scoped, tag = 'scoped memory for tpu_custom_call.1']
    #allocation5 [shape = 'u8[131072]{0}', space=vmem, size = 0x20000, scoped, tag = 'input window, operand 1']
    #allocation6 [shape = 's32[2]{0}', space=sflag, size = 0x8, scoped, tag = 'scoped memory for tpu_custom_call.1']
    #allocation7 [shape = 'u8[1024]{0}', space=vmem, size = 0x400, scoped, tag = 'input window, operand 2, single buffered']
    #allocation8 [shape = 'u8[32768]{0}', space=vmem, size = 0x8000, scoped, tag = 'output window, operand 0']
    %8 = vsyncpa [#allocation3], 0
    %s9 = scalar_lea.sflag [#allocation3], 1
    %10 = vsyncpa %s9, 0
    %11 = vsyncpa [#allocation6], 0
    %s12 = scalar_lea.sflag [#allocation6], 1
    %13 = vsyncpa %s12, 0
    %14 = vsyncpa [#allocation4], 0
    %s15 = scalar_lea.sflag [#allocation4], 1
    %16 = vsyncpa %s15, 0
    loop: start=0, step=1, limit=6
    $region2: #{tpu_custom_call.1} parent=1 // loop_pre_header
      _
    $region3: #{tpu_custom_call.1} parent=1 // loop_header
      %s18 = sphi 0, %s22
      %p19 = scmp.ge.s32.totalorder %s18, 6
      %s25 = sphi 0, %s37
      %s26 = sphi 0, %s33
      %s27 = sphi 0, %s25
      %s28 = sphi 0, %s26
      %s29 = sphi 0, %s27
      %s30 = sphi 0, %s28
      %s42 = sphi 0, %s44
      %s45 = sphi 0, %s42
      %s46 = sphi 0, %s45
      %s62 = sphi 0, %s46
      %s68 = sphi 0, %s70
      %s71 = sphi 0, %s68
      %s72 = sphi 0, %s71
      %s88 = sphi 0, %s72
      %s92 = sphi 0, %s92
      %s94 = sphi 0, %s92
      %s95 = sphi 0, %s94
      %s109 = sphi 0, %s95
      %s117 = sphi 0, %s119
      %s120 = sphi 0, %s117
      %s121 = sphi 0, %s120
      %s137 = sphi 0, %s121
    $region4: #{tpu_custom_call.1} parent=1 // loop_header_branch
      %21 = sbr.rel (%p19) target = $region8
    $region5: #{tpu_custom_call.1} parent=1 // loop_body
      %s23 = ssub.s32 %s18, 1
      %s24 = ssub.s32 %s18, 2
      %s31 = sadd.s32 1, %s26
      %p32 = scmp.ge.s32.totalorder %s31, 2
      %s33 = scalar_select %p32, 0, %s31
      %s34 = sadd.s32 1, %s25
      %s35 = scalar_select %p32, %s34, %s25
      %p36 = scmp.ge.s32.totalorder %s35, 2
      %s37 = scalar_select %p36, 0, %s35
      %s38 = ssub.s32 %s25, %s37
      %s39 = ssub.s32 %s26, %s33
      %s40 = sor.u32 %s38, %s39
      %p41 = scmp.eq.s32.totalorder %s40, 0
      %s43 = sadd.s32 %s42, 1
      %s44 = scalar_select %p41, %s42, %s43
      %p47 = pneg %p41
      %p48 = scmp.eq.s32.totalorder %s18, 3
      %p49 = por %p47, %p48
      %p50 = scmp.ne.s32.totalorder %s42, %s45
      %p51 = scmp.eq.s32.totalorder %s18, 0
      %p52 = por %p50, %p51
      %p53 = scmp.ne.s32.totalorder %s42, %s45
      %p54 = scmp.eq.s32.totalorder %s23, 3
      %p55 = por %p53, %p54
      %p56 = scmp.ne.s32.totalorder %s45, %s46
      %p57 = scmp.eq.s32.totalorder %s23, 0
      %p58 = por %p56, %p57
      %p59 = scmp.ne.s32.totalorder %s45, %s46
      %p60 = scmp.eq.s32.totalorder %s24, 3
      %p61 = por %p59, %p60
      %p63 = scmp.ne.s32.totalorder %s46, %s62
      %p64 = scmp.eq.s32.totalorder %s24, 0
      %p65 = por %p63, %p64
      %s66 = ssub.s32 %s26, %s33
      %p67 = scmp.eq.s32.totalorder %s66, 0
      %s69 = sadd.s32 %s68, 1
      %s70 = scalar_select %p67, %s68, %s69
      %p73 = pneg %p67
      %p74 = scmp.eq.s32.totalorder %s18, 3
      %p75 = por %p73, %p74
      %p76 = scmp.ne.s32.totalorder %s68, %s71
      %p77 = scmp.eq.s32.totalorder %s18, 0
      %p78 = por %p76, %p77
      %p79 = scmp.ne.s32.totalorder %s68, %s71
      %p80 = scmp.eq.s32.totalorder %s23, 3
      %p81 = por %p79, %p80
      %p82 = scmp.ne.s32.totalorder %s71, %s72
      %p83 = scmp.eq.s32.totalorder %s23, 0
      %p84 = por %p82, %p83
      %p85 = scmp.ne.s32.totalorder %s71, %s72
      %p86 = scmp.eq.s32.totalorder %s24, 3
      %p87 = por %p85, %p86
      %p89 = scmp.ne.s32.totalorder %s72, %s88
      %p90 = scmp.eq.s32.totalorder %s24, 0
      %p91 = por %p89, %p90
      %s93 = sadd.s32 %s92, 1
      %p96 = scmp.eq.s32.totalorder %s18, 3
      %p97 = scmp.ne.s32.totalorder %s92, %s94
      %p98 = scmp.eq.s32.totalorder %s18, 0
      %p99 = por %p97, %p98
      %p100 = scmp.ne.s32.totalorder %s92, %s94
      %p101 = scmp.eq.s32.totalorder %s23, 3
      %p102 = por %p100, %p101
      %p103 = scmp.ne.s32.totalorder %s94, %s95
      %p104 = scmp.eq.s32.totalorder %s23, 0
      %p105 = por %p103, %p104
      %p106 = scmp.ne.s32.totalorder %s94, %s95
      %p107 = scmp.eq.s32.totalorder %s24, 3
      %p108 = por %p106, %p107
      %p110 = scmp.ne.s32.totalorder %s95, %s109
      %p111 = scmp.eq.s32.totalorder %s24, 0
      %p112 = por %p110, %p111
      %s113 = ssub.s32 %s25, %s37
      %s114 = ssub.s32 %s26, %s33
      %s115 = sor.u32 %s113, %s114
      %p116 = scmp.eq.s32.totalorder %s115, 0
      %s118 = sadd.s32 %s117, 1
      %s119 = scalar_select %p116, %s117, %s118
      %p122 = pneg %p116
      %p123 = scmp.eq.s32.totalorder %s18, 3
      %p124 = por %p122, %p123
      %p125 = scmp.ne.s32.totalorder %s117, %s120
      %p126 = scmp.eq.s32.totalorder %s18, 0
      %p127 = por %p125, %p126
      %p128 = scmp.ne.s32.totalorder %s117, %s120
      %p129 = scmp.eq.s32.totalorder %s23, 3
      %p130 = por %p128, %p129
      %p131 = scmp.ne.s32.totalorder %s120, %s121
      %p132 = scmp.eq.s32.totalorder %s23, 0
      %p133 = por %p131, %p132
      %p134 = scmp.ne.s32.totalorder %s120, %s121
      %p135 = scmp.eq.s32.totalorder %s24, 3
      %p136 = por %p134, %p135
      %p138 = scmp.ne.s32.totalorder %s121, %s137
      %p139 = scmp.eq.s32.totalorder %s24, 0
      %p140 = por %p138, %p139
      %p141 = scmp.le.s32.totalorder 1, %s18
      %p142 = scmp.lt.s32.totalorder %s18, 5
      %p143 = pnand %p141, %p142
      %p144 = pneg %p143
      // Predicated region
      $region9: #{tpu_custom_call.1} parent=5 // pred_check
        _
      $region10: #{tpu_custom_call.1} parent=5 // pred_check_branch
        %146 = sbr.rel (%p143) target = $region12
      $region11: #{tpu_custom_call.1} parent=5 // pred_region
        %s147 = ssub.s32 %s18, 1
        // Predicated region
        $region13: #{tpu_custom_call.1} parent=11 // pred_check
          %p148 = pneg %p105
        $region14: #{tpu_custom_call.1} parent=11 // pred_check_branch
          %150 = sbr.rel (%p148) target = $region16
        $region15: #{tpu_custom_call.1} parent=11 // pred_region
          %152 = vsyncadd [#allocation6], 0
          %s154 = sshll.u32 %s2, 4
          %s155 = int_to_ptr.hbm [resolvable:$true] %s154
          %s156 = sshll.u32 [#allocation7], 4
          %s157 = int_to_ptr.vmem [resolvable:$true] %s156
          %159 = dma.hbm_to_vmem [thread:$0]  %s155, 32, %s157, [#allocation6]
        $region16: #{tpu_custom_call.1} parent=11 // pred_fallthru
          _
      $region12: #{tpu_custom_call.1} parent=5 // pred_fallthru
        _
      %p160 = scmp.lt.s32.totalorder %s18, 4
      // Predicated region
      $region17: #{tpu_custom_call.1} parent=5 // pred_check
        %p161 = pneg %p160
      $region18: #{tpu_custom_call.1} parent=5 // pred_check_branch
        %163 = sbr.rel (%p161) target = $region20
      $region19: #{tpu_custom_call.1} parent=5 // pred_region
        // Predicated region
        $region21: #{tpu_custom_call.1} parent=19 // pred_check
          %p164 = pneg %p52
        $region22: #{tpu_custom_call.1} parent=19 // pred_check_branch
          %166 = sbr.rel (%p164) target = $region24
        $region23: #{tpu_custom_call.1} parent=19 // pred_region
          %s167 = sand.u32 %s42, 1
          %s168 = scalar_lea.sflag [#allocation3], %s167
          %s169 = sand.u32 %s42, 1
          %s170 = smul.addr %s169, 8
          %s171 = scalar_lea.vmem [#allocation2], %s170
          %173 = vsyncadd %s168, 0
          %s174 = smul.addr %s26, 2
          %s175 = smul.addr %s25, 4
          %s176 = sadd.s32 %s174, %s175
          %s177 = smul.addr %s176, 4
          %s178 = scalar_lea.hbm %s0, %s177
          %s179 = sshll.u32 %s178, 4
          %s180 = int_to_ptr.hbm [resolvable:$true] %s179
          %s181 = sshll.u32 %s171, 4
          %s182 = int_to_ptr.vmem [resolvable:$true] %s181
          %187 = dma.hbm_to_vmem [thread:$0]  %s180, 128, %s182, %s168, 64, 64, 4
        $region24: #{tpu_custom_call.1} parent=19 // pred_fallthru
          _
        // Predicated region
        $region25: #{tpu_custom_call.1} parent=19 // pred_check
          %p188 = pneg %p78
        $region26: #{tpu_custom_call.1} parent=19 // pred_check_branch
          %190 = sbr.rel (%p188) target = $region28
        $region27: #{tpu_custom_call.1} parent=19 // pred_region
          %s191 = sand.u32 %s18, 1
          %s192 = scalar_lea.sflag [#allocation6], %s191
          %s193 = sand.u32 %s68, 1
          %s194 = smul.addr %s193, 128
          %s195 = scalar_lea.vmem [#allocation5], %s194
          %197 = vsyncadd %s192, 0
          %s198 = smul.addr %s26, 32
          %s199 = smul.addr %s198, 4
          %s200 = scalar_lea.hbm %s1, %s199
          %s201 = sshll.u32 %s200, 4
          %s202 = int_to_ptr.hbm [resolvable:$true] %s201
          %s203 = sshll.u32 %s195, 4
          %s204 = int_to_ptr.vmem [resolvable:$true] %s203
          %209 = dma.hbm_to_vmem [thread:$0]  %s202, 2048, %s204, %s192, 128, 128, 8
        $region28: #{tpu_custom_call.1} parent=19 // pred_fallthru
          _
      $region20: #{tpu_custom_call.1} parent=5 // pred_fallthru
        _
      %p210 = scmp.le.s32.totalorder 1, %s18
      %p211 = scmp.lt.s32.totalorder %s18, 5
      %p212 = pnand %p210, %p211
      %p213 = pneg %p212
      // Predicated region
      $region29: #{tpu_custom_call.1} parent=5 // pred_check
        _
      $region30: #{tpu_custom_call.1} parent=5 // pred_check_branch
        %215 = sbr.rel (%p212) target = $region32
      $region31: #{tpu_custom_call.1} parent=5 // pred_region
        %s216 = ssub.s32 %s18, 1
        %s217 = sand.u32 %s45, 1
        %s218 = scalar_lea.sflag [#allocation3], %s217
        %s219 = sand.u32 %s45, 1
        %s220 = smul.addr %s219, 8
        %s221 = scalar_lea.vmem [#allocation2], %s220
        // Predicated region
        $region33: #{tpu_custom_call.1} parent=31 // pred_check
          %p222 = pneg %p58
        $region34: #{tpu_custom_call.1} parent=31 // pred_check_branch
          %224 = sbr.rel (%p222) target = $region36
        $region35: #{tpu_custom_call.1} parent=31 // pred_region
          %226 = dma.done %s218, 128
        $region36: #{tpu_custom_call.1} parent=31 // pred_fallthru
          _
        %s227 = sand.u32 %s23, 1
        %s228 = scalar_lea.sflag [#allocation6], %s227
        %s229 = sand.u32 %s71, 1
        %s230 = smul.addr %s229, 128
        %s231 = scalar_lea.vmem [#allocation5], %s230
        // Predicated region
        $region37: #{tpu_custom_call.1} parent=31 // pred_check
          %p232 = pneg %p84
        $region38: #{tpu_custom_call.1} parent=31 // pred_check_branch
          %234 = sbr.rel (%p232) target = $region40
        $region39: #{tpu_custom_call.1} parent=31 // pred_region
          %236 = dma.done %s228, 2048
        $region40: #{tpu_custom_call.1} parent=31 // pred_fallthru
          _
        // Predicated region
        $region41: #{tpu_custom_call.1} parent=31 // pred_check
          %p237 = pneg %p105
        $region42: #{tpu_custom_call.1} parent=31 // pred_check_branch
          %239 = sbr.rel (%p237) target = $region44
        $region43: #{tpu_custom_call.1} parent=31 // pred_region
          %241 = dma.done [#allocation6], 32
        $region44: #{tpu_custom_call.1} parent=31 // pred_fallthru
          _
        %s242 = sand.u32 %s45, 1
        %s243 = scalar_lea.sflag [#allocation3], %s242
        %s244 = sand.u32 %s45, 1
        %s245 = smul.addr %s244, 8
        %s246 = scalar_lea.vmem [#allocation2], %s245
        %p247 = pneg %p58
        %p248 = pneg %p55
        %s249 = sand.u32 %s23, 1
        %s250 = scalar_lea.sflag [#allocation6], %s249
        %s251 = sand.u32 %s71, 1
        %s252 = smul.addr %s251, 128
        %s253 = scalar_lea.vmem [#allocation5], %s252
        %p254 = pneg %p84
        %p255 = pneg %p81
        %p256 = pneg %p105
        %p257 = pneg %p102
        %p258 = pneg %p133
        %p259 = pneg %p130
        %s260 = sand.u32 %s120, 1
        %s261 = scalar_lea.sflag [#allocation4], %s260
        %s262 = sand.u32 %s120, 1
        %s263 = smul.addr %s262, 32
        %s264 = scalar_lea.vmem [#allocation8], %s263
        %v265 = vld [vmem:[%s221] sm:$0xf]
        %v266 = vld [vmem:[%s221 + $0x4] sm:$0xf]
        %v267 = vld [vmem:[%s231] sm:$0xff]
        %v268 = vld [vmem:[%s231 + $0x8] sm:$0xff]
        %v269 = vld [vmem:[%s231 + $0x10] sm:$0xff]
        %v270 = vld [vmem:[%s231 + $0x18] sm:$0xff]
        %v271 = vld [vmem:[%s231 + $0x20] sm:$0xff]
        %v272 = vld [vmem:[%s231 + $0x28] sm:$0xff]
        %v273 = vld [vmem:[%s231 + $0x30] sm:$0xff]
        %v274 = vld [vmem:[%s231 + $0x38] sm:$0xff]
        %v275 = vld [vmem:[%s231 + $0x40] sm:$0xff]
        %v276 = vld [vmem:[%s231 + $0x48] sm:$0xff]
        %v277 = vld [vmem:[%s231 + $0x50] sm:$0xff]
        %v278 = vld [vmem:[%s231 + $0x58] sm:$0xff]
        %v279 = vld [vmem:[%s231 + $0x60] sm:$0xff]
        %v280 = vld [vmem:[%s231 + $0x68] sm:$0xff]
        %v281 = vld [vmem:[%s231 + $0x70] sm:$0xff]
        %v282 = vld [vmem:[%s231 + $0x78] sm:$0xff]
        %v283 = vld [vmem:[#allocation7] sm:$0x3]
        %v285 = vperm.slane %v283, 0
        %v286 = vperm.slane %v283, 1
        %v291 = vunpack.c.l.b16 %v265
        %v292 = vunpack.c.l.b16 %v266
        %v293 = vpack.c.b16 %v292, %v291
        %v311 = vunpack.c.l.b16 %v267
        %v312 = vunpack.c.h.b16 %v267
        %v313 = vunpack.c.l.b16 %v268
        %v314 = vunpack.c.h.b16 %v268
        %v315 = vunpack.c.l.b16 %v269
        %v316 = vunpack.c.h.b16 %v269
        %v317 = vunpack.c.l.b16 %v270
        %v318 = vunpack.c.h.b16 %v270
        %v319 = vunpack.c.l.b16 %v271
        %v320 = vunpack.c.h.b16 %v271
        %v321 = vunpack.c.l.b16 %v272
        %v322 = vunpack.c.h.b16 %v272
        %v323 = vunpack.c.l.b16 %v273
        %v324 = vunpack.c.h.b16 %v273
        %v325 = vunpack.c.l.b16 %v274
        %v326 = vunpack.c.h.b16 %v274
        %v327 = vunpack.c.l.b16 %v275
        %v328 = vunpack.c.h.b16 %v275
        %v329 = vunpack.c.l.b16 %v276
        %v330 = vunpack.c.h.b16 %v276
        %v331 = vunpack.c.l.b16 %v277
        %v332 = vunpack.c.h.b16 %v277
        %v333 = vunpack.c.l.b16 %v278
        %v334 = vunpack.c.h.b16 %v278
        %v335 = vunpack.c.l.b16 %v279
        %v336 = vunpack.c.h.b16 %v279
        %v337 = vunpack.c.l.b16 %v280
        %v338 = vunpack.c.h.b16 %v280
        %v339 = vunpack.c.l.b16 %v281
        %v340 = vunpack.c.h.b16 %v281
        %v341 = vunpack.c.l.b16 %v282
        %v342 = vunpack.c.h.b16 %v282
        %v343 = vpack.c.b16 %v313, %v311
        %v344 = vpack.c.b16 %v314, %v312
        %v345 = vpack.c.b16 %v317, %v315
        %v346 = vpack.c.b16 %v318, %v316
        %v347 = vpack.c.b16 %v321, %v319
        %v348 = vpack.c.b16 %v322, %v320
        %v349 = vpack.c.b16 %v325, %v323
        %v350 = vpack.c.b16 %v326, %v324
        %v351 = vpack.c.b16 %v329, %v327
        %v352 = vpack.c.b16 %v330, %v328
        %v353 = vpack.c.b16 %v333, %v331
        %v354 = vpack.c.b16 %v334, %v332
        %v355 = vpack.c.b16 %v337, %v335
        %v356 = vpack.c.b16 %v338, %v336
        %v357 = vpack.c.b16 %v341, %v339
        %v358 = vpack.c.b16 %v342, %v340
        %375 = vmatpush.bf16.msra.mxu0 %v357
        %376 = vmatpush.bf16.msra.mxu0 %v355
        %377 = vmatpush.bf16.msra.mxu0 %v353
        %378 = vmatpush.bf16.msra.mxu0 %v351
        %379 = vmatpush.bf16.msra.mxu0 %v349
        %380 = vmatpush.bf16.msra.mxu0 %v347
        %381 = vmatpush.bf16.msra.mxu0 %v345
        %382 = vmatpush.bf16.msra.mxu0 %v343
        %383 = vmatmul.bf16.gmra.mxu0 %v293
        %v384 = vpop.f32.mrf.mxu0
        %v385 = vadd.f32 %v285, %v384
        %v386 = vpop.f32.mrf.mxu0
        %v387 = vadd.f32 %v285, %v386
        %388 = vdwg.mxu0
        %389 = vmatpush.bf16.msra.mxu0 %v358
        %390 = vmatpush.bf16.msra.mxu0 %v356
        %391 = vmatpush.bf16.msra.mxu0 %v354
        %392 = vmatpush.bf16.msra.mxu0 %v352
        %393 = vmatpush.bf16.msra.mxu0 %v350
        %394 = vmatpush.bf16.msra.mxu0 %v348
        %395 = vmatpush.bf16.msra.mxu0 %v346
        %396 = vmatpush.bf16.msra.mxu0 %v344
        %397 = vmatmul.bf16.gmra.mxu0 %v293
        %v398 = vpop.f32.mrf.mxu0
        %v399 = vadd.f32 %v286, %v398
        %v400 = vpop.f32.mrf.mxu0
        %v401 = vadd.f32 %v286, %v400
        %402 = vdwg.mxu0
        %v403 = vmax.f32 %v385, 0.0
        %v404 = vmax.f32 %v399, 0.0
        %v405 = vmax.f32 %v387, 0.0
        %v406 = vmax.f32 %v401, 0.0
        %407 = vst [vmem:[%s264] sm:$0xff] %v403
        %408 = vst [vmem:[%s264 + $0x8] sm:$0xff] %v404
        %409 = vst [vmem:[%s264 + $0x10] sm:$0xff] %v405
        %410 = vst [vmem:[%s264 + $0x18] sm:$0xff] %v406
        %s411 = sand.u32 %s120, 1
        %s412 = scalar_lea.sflag [#allocation4], %s411
        %s413 = sand.u32 %s120, 1
        %s414 = smul.addr %s413, 32
        %s415 = scalar_lea.vmem [#allocation8], %s414
        // Predicated region
        $region45: #{tpu_custom_call.1} parent=31 // pred_check
          %p416 = pneg %p130
        $region46: #{tpu_custom_call.1} parent=31 // pred_check_branch
          %418 = sbr.rel (%p416) target = $region48
        $region47: #{tpu_custom_call.1} parent=31 // pred_region
          %420 = vsyncadd %s412, 0
          %s421 = smul.addr %s28, 4
          %s422 = smul.addr %s27, 8
          %s423 = sadd.s32 %s421, %s422
          %s424 = smul.addr %s423, 8
          %s425 = scalar_lea.hbm %s3, %s424
          %s426 = sshll.u32 %s415, 4
          %s427 = int_to_ptr.vmem [resolvable:$true] %s426
          %s428 = sshll.u32 %s425, 4
          %s429 = int_to_ptr.hbm [resolvable:$true] %s428
          %434 = dma.vmem_to_hbm [thread:$0]  %s427, 512, %s429, %s412, 256, 256, 16
        $region48: #{tpu_custom_call.1} parent=31 // pred_fallthru
          _
      $region32: #{tpu_custom_call.1} parent=5 // pred_fallthru
        _
      %p435 = scmp.le.s32.totalorder 2, %s18
      // Predicated region
      $region49: #{tpu_custom_call.1} parent=5 // pred_check
        %p436 = pneg %p435
      $region50: #{tpu_custom_call.1} parent=5 // pred_check_branch
        %438 = sbr.rel (%p436) target = $region52
      $region51: #{tpu_custom_call.1} parent=5 // pred_region
        %s439 = ssub.s32 %s18, 2
        // Predicated region
        $region53: #{tpu_custom_call.1} parent=51 // pred_check
          %p440 = pneg %p136
        $region54: #{tpu_custom_call.1} parent=51 // pred_check_branch
          %442 = sbr.rel (%p440) target = $region56
        $region55: #{tpu_custom_call.1} parent=51 // pred_region
          %s443 = sand.u32 %s121, 1
          %s444 = scalar_lea.sflag [#allocation4], %s443
          %s445 = sand.u32 %s121, 1
          %s446 = smul.addr %s445, 32
          %s447 = scalar_lea.vmem [#allocation8], %s446
          %449 = dma.done %s444, 512
        $region56: #{tpu_custom_call.1} parent=51 // pred_fallthru
          _
      $region52: #{tpu_custom_call.1} parent=5 // pred_fallthru
        _
    $region6: #{tpu_custom_call.1} parent=1 // loop_footer
      %s22 = sadd.s32 1, %s18
    $region7: #{tpu_custom_call.1} parent=1 // loop_footer_branch
      %17 = sbr.rel target = $region3
    $region8: #{tpu_custom_call.1} parent=1 // loop_exit
      _
    %450 = vsyncpa [#allocation3], 1
    %s451 = scalar_lea.sflag [#allocation3], 1
    %452 = vsyncpa %s451, 1
    %453 = vsyncpa [#allocation6], 1
    %s454 = scalar_lea.sflag [#allocation6], 1
    %455 = vsyncpa %s454, 1
    %456 = vsyncpa [#allocation4], 1
    %s457 = scalar_lea.sflag [#allocation4], 1
    %458 = vsyncpa %s457, 1

</llo_original>
